<compile_context>
chip_gen: v7x
topology: tpu7x:2x2x1
jax: 0.10.0
libtpu: 0.0.40
codegen_flags: <defaults>
</compile_context>

<pallas_src>
import functools

import jax
import jax.numpy as jnp
from jax import lax
from jax.experimental import pallas as pl
from jax.experimental.pallas import tpu as pltpu

_VMEM_LIMIT = 32 * 1024 * 1024  # blocks are tiny now; safe on v5e/v6e/v7x


# -----------------------------------------------------------------------------
# Pass 1: conv as im2col matmul (bf16 operands, f32 accumulation) + per-tile BN partials.
# Fully parallel over M-tiles: every grid step owns its y tile and its partial-stat rows.
# -----------------------------------------------------------------------------
def _conv_stats_kernel(p_ref, w_ref, y_ref, psum_ref, psq_ref):
    y = jnp.dot(p_ref[...], w_ref[...], preferred_element_type=jnp.float32)
    y_ref[...] = y.astype(y_ref.dtype)                    # bf16 intermediate -> HBM
    psum_ref[0] = jnp.sum(y, axis=0, keepdims=True)       # f32 per-tile partial sums
    psq_ref[0] = jnp.sum(y * y, axis=0, keepdims=True)


# -----------------------------------------------------------------------------
# Pass 2 (fused): BN affine + ReLU + MaxPool2d(3, stride=2, padding=1).
# Input layout: (N, row_parity, col_parity, Hp, Wp*Cout) -- one image per grid step.
# -----------------------------------------------------------------------------
def _bn_relu_pool_kernel(y_ref, scale_ref, shift_ref, o_ref, *, cout):
    hp, wc = y_ref.shape[3], y_ref.shape[4]
    scale = jnp.broadcast_to(scale_ref[...], (hp, wc))    # hoisted broadcasts
    shift = jnp.broadcast_to(shift_ref[...], (hp, wc))

    def bn_relu(v):                                        # v: (Hp, Wp*Cout) bf16
        return jnp.maximum(v.astype(jnp.float32) * scale + shift, 0.0)

    z_ee = bn_relu(y_ref[0, 0, 0])   # conv rows 2i  , cols 2j
    z_eo = bn_relu(y_ref[0, 0, 1])   # conv rows 2i  , cols 2j+1
    z_oe = bn_relu(y_ref[0, 1, 0])   # conv rows 2i+1, cols 2j
    z_oo = bn_relu(y_ref[0, 1, 1])   # conv rows 2i+1, cols 2j+1

    rows = lax.broadcasted_iota(jnp.int32, (hp, wc), 0)
    lanes = lax.broadcasted_iota(jnp.int32, (hp, wc), 1)
    mask_h = rows >= 1               # hoisted boundary masks (reused across shifts)
    mask_w = lanes >= cout
    zero = jnp.zeros((hp, wc), jnp.float32)

    def shift_w(v):  # v[i, j] -> v[i, j-1]; zero-filled at j == 0 (safe post-ReLU)
        return jnp.where(mask_w, pltpu.roll(v, shift=cout, axis=1), zero)

    def shift_h(v):  # v[i, j] -> v[i-1, j]; zero-filled at i == 0 (safe post-ReLU)
        return jnp.where(mask_h, pltpu.roll(v, shift=1, axis=0), zero)

    w_oo = shift_w(z_oo)
    m = jnp.maximum(z_ee, z_eo)
    m = jnp.maximum(m, shift_w(z_eo))
    m = jnp.maximum(m, z_oe)
    m = jnp.maximum(m, shift_h(z_oe))
    m = jnp.maximum(m, z_oo)
    m = jnp.maximum(m, w_oo)
    m = jnp.maximum(m, shift_h(z_oo))
    m = jnp.maximum(m, shift_h(w_oo))
    o_ref[0] = m


# Pass 2 when the Stem has no stem_downsample maxpool (downsample_factor == 2).
def _bn_relu_kernel(y_ref, scale_ref, shift_ref, o_ref):
    o_ref[...] = jnp.maximum(
        y_ref[...].astype(jnp.float32) * scale_ref[...] + shift_ref[...], 0.0)


# -----------------------------------------------------------------------------
# Public wrapper (NCHW in / NCHW out), training-mode BatchNorm (batch statistics).
# -----------------------------------------------------------------------------
def stem_forward(x_nchw, weight, gamma, beta, *, eps=1e-5,
                 downsample_factor=4, patch_size=None, tm=1024):
    # TODO(synk): patchify variant (stride = patch_size, no pool) not implemented.
    assert patch_size is None
    assert downsample_factor % 2 == 0 and downsample_factor >= 2
    assert tm % 8 == 0
    use_pool = downsample_factor // 2 > 1
    if use_pool:
        # TODO(synk): fused pool pass assumes MaxPool2d(3, stride=2, padding=1).
        assert downsample_factor == 4

    N, Cin, H, W = x_nchw.shape
    Cout, _, K, _ = weight.shape
    stride = 2
    pad = (K - 1) // 2                       # torchvision Conv2dNormActivation default
    Ho = (H + 2 * pad - K) // stride + 1
    Wo = (W + 2 * pad - K) // stride + 1
    kk_cin = K * K * Cin

    # ---- im2col (wrapper glue; bf16, unpadded contraction dim, parity-ordered) ----
    # TODO(synk): form patches fully in-kernel from a haloed NHWC block to also remove
    # the K*K-fold duplication of the (small, Cin-wide) input volume in HBM.
    x = jnp.transpose(x_nchw, (0, 2, 3, 1)).astype(jnp.bfloat16)           # NHWC, bf16
    xp = jnp.pad(x, ((0, 0), (pad, pad), (pad, pad), (0, 0)))

    if use_pool:
        # Build patches already split into the 4 (row, col) parity phases of the conv
        # output, so pass-2's 3x3/stride-2 pool only needs +-1 shifts of whole tiles and
        # no extra full-tensor transpose round-trips through HBM between the passes.
        assert Ho % 2 == 0 and Wo % 2 == 0, "fused pool path assumes even conv output"
        Hp, Wp = Ho // 2, Wo // 2
        row_phases = []
        for rp in range(2):
            col_phases = []
            for cp in range(2):
                taps = []
                for kh in range(K):
                    for kw in range(K):
                        r0 = 2 * rp + kh
                        c0 = 2 * cp + kw
                        taps.append(xp[:, r0:r0 + 4 * (Hp - 1) + 1:4,
                                       c0:c0 + 4 * (Wp - 1) + 1:4, :])
                col_phases.append(jnp.concatenate(taps, axis=-1))          # (N,Hp,Wp,kk)
            row_phases.append(jnp.stack(col_phases, axis=1))               # (N,2,Hp,Wp,kk)
        patches = jnp.stack(row_phases, axis=1)                            # (N,2,2,Hp,Wp,kk)
    else:
        taps = []
        for kh in range(K):
            for kw in range(K):
                taps.append(xp[:, kh:kh + stride * (Ho - 1) + 1:stride,
                               kw:kw + stride * (Wo - 1) + 1:stride, :])
        patches = jnp.concatenate(taps, axis=-1)                           # (N,Ho,Wo,kk)

    M = N * Ho * Wo
    grid_m = pl.cdiv(M, tm)
    m_pad = grid_m * tm
    patches2d = patches.reshape(M, kk_cin)
    if m_pad != M:
        patches2d = jnp.pad(patches2d, ((0, m_pad - M), (0, 0)))

    # weight (Cout, Cin, K, K) -> (K*K*Cin, Cout), matching the (kh, kw, cin) patch order
    w_mat = jnp.transpose(weight, (2, 3, 1, 0)).reshape(kk_cin, Cout).astype(jnp.bfloat16)

    cost1 = pl.CostEstimate(
        flops=int(2 * m_pad * kk_cin * Cout + 4 * m_pad * Cout),
        transcendentals=0,
        bytes_accessed=int(m_pad * kk_cin * 2 + kk_cin * Cout * 2
                           + m_pad * Cout * 2 + 2 * grid_m * Cout * 4))

    y, psum, psq = pl.pallas_call(
        _conv_stats_kernel,
        grid=(grid_m,),
        out_shape=(
            jax.ShapeDtypeStruct((m_pad, Cout), jnp.bfloat16),    # bf16 intermediate
            jax.ShapeDtypeStruct((grid_m, 1, Cout), jnp.float32),  # per-tile sum(y)
            jax.ShapeDtypeStruct((grid_m, 1, Cout), jnp.float32),  # per-tile sum(y*y)
        ),
        in_specs=[
            pl.BlockSpec((tm, kk_cin), lambda i: (i, 0)),
            pl.BlockSpec((kk_cin, Cout), lambda i: (0, 0)),
        ],
        out_specs=(
            pl.BlockSpec((tm, Cout), lambda i: (i, 0)),
            pl.BlockSpec((1, 1, Cout), lambda i: (i, 0, 0)),
            pl.BlockSpec((1, 1, Cout), lambda i: (i, 0, 0)),
        ),
        compiler_params=pltpu.CompilerParams(
            dimension_semantics=("parallel",),   # no cross-step accumulator -> megacore OK
            vmem_limit_bytes=_VMEM_LIMIT),
        cost_estimate=cost1,
    )(patches2d, w_mat)

    # ---- tiny BN finalize on the (grid_m, Cout) partials (wrapper-side, negligible) ----
    # NOTE: E[y^2]-E[y]^2 in f32, clamped at 0 -- fine at bf16-level tolerance.
    count = float(M)
    mean = jnp.sum(psum, axis=(0, 1)) / count
    var = jnp.maximum(jnp.sum(psq, axis=(0, 1)) / count - mean * mean, 0.0)
    scale = gamma.astype(jnp.float32) * lax.rsqrt(var + eps)
    shift = beta.astype(jnp.float32) - mean * scale

    if not use_pool:
        cost2 = pl.CostEstimate(
            flops=int(3 * m_pad * Cout), transcendentals=0,
            bytes_accessed=int(m_pad * Cout * 2 + m_pad * Cout * 4 + 2 * Cout * 4))
        z = pl.pallas_call(
            _bn_relu_kernel,
            grid=(grid_m,),
            out_shape=jax.ShapeDtypeStruct((m_pad, Cout), jnp.float32),
            in_specs=[
                pl.BlockSpec((tm, Cout), lambda i: (i, 0)),
                pl.BlockSpec((1, Cout), lambda i: (0, 0)),
                pl.BlockSpec((1, Cout), lambda i: (0, 0)),
            ],
            out_specs=pl.BlockSpec((tm, Cout), lambda i: (i, 0)),
            compiler_params=pltpu.CompilerParams(
                dimension_semantics=("parallel",),
                vmem_limit_bytes=_VMEM_LIMIT),
            cost_estimate=cost2,
        )(y, scale.reshape(1, Cout), shift.reshape(1, Cout))
        z = z[:M].reshape(N, Ho, Wo, Cout)
        return jnp.transpose(z, (0, 3, 1, 2))

    # ---- Pass 2: BN affine + ReLU fused with MaxPool2d(3, stride=2, padding=1) ----
    wc = Wp * Cout
    y_valid = y if m_pad == M else y[:M]
    y_ph = y_valid.reshape(N, 2, 2, Hp, wc)               # row-major-compatible (free)
    scale_t = jnp.tile(scale, Wp).reshape(1, wc)          # per-channel -> per (w, channel) lane
    shift_t = jnp.tile(shift, Wp).reshape(1, wc)

    cost2 = pl.CostEstimate(
        flops=int(N * Hp * wc * 21), transcendentals=0,
        bytes_accessed=int(N * 4 * Hp * wc * 2 + N * Hp * wc * 4 + 2 * wc * 4))

    pooled = pl.pallas_call(
        functools.partial(_bn_relu_pool_kernel, cout=Cout),
        grid=(N,),
        out_shape=jax.ShapeDtypeStruct((N, Hp, wc), jnp.float32),
        in_specs=[
            pl.BlockSpec((1, 2, 2, Hp, wc), lambda n: (n, 0, 0, 0, 0)),
            pl.BlockSpec((1, wc), lambda n: (0, 0)),
            pl.BlockSpec((1, wc), lambda n: (0, 0)),
        ],
        out_specs=pl.BlockSpec((1, Hp, wc), lambda n: (n, 0, 0)),
        compiler_params=pltpu.CompilerParams(
            dimension_semantics=("parallel",),     # batch axis -> v7x megacore
            vmem_limit_bytes=_VMEM_LIMIT),
        cost_estimate=cost2,
    )(y_ph, scale_t, shift_t)
    # TODO(synk): for very large H*W, tile pass 2 over Hp rows with a 1-row halo to bound
    # VMEM; bf16 + unpadded Cout already shrinks the whole-image block ~8x vs the old layout.

    out = pooled.reshape(N, Hp, Wp, Cout)
    return jnp.transpose(out, (0, 3, 1, 2))                # back to NCHW


# -----------------------------------------------------------------------------
# Pure-XLA reference for the correctness check.
# -----------------------------------------------------------------------------
def _reference(x_nchw, weight, gamma, beta, eps=1e-5, downsample_factor=4):
    K = weight.shape[-1]
    pad = (K - 1) // 2
    conv = lax.conv_general_dilated(
        x_nchw, weight, window_strides=(2, 2),
        padding=[(pad, pad), (pad, pad)],
        dimension_numbers=('NCHW', 'OIHW', 'NCHW'))
    mean = conv.mean(axis=(0, 2, 3), keepdims=True)
    var = ((conv - mean) ** 2).mean(axis=(0, 2, 3), keepdims=True)
    z = (conv - mean) * lax.rsqrt(var + eps)
    z = z * gamma.reshape(1, -1, 1, 1) + beta.reshape(1, -1, 1, 1)
    z = jnp.maximum(z, 0.0)
    if downsample_factor // 2 > 1:
        s = downsample_factor // 2
        z = lax.reduce_window(z, -jnp.inf, lax.max,
                              window_dimensions=(1, 1, 3, 3),
                              window_strides=(1, 1, s, s),
                              padding=[(0, 0), (0, 0), (1, 1), (1, 1)])
    return z


if __name__ == "__main__":
    # Stem(width_in=4, width_out=32, kernel_size=3, BatchNorm2d, ReLU,
    #      downsample_factor=4, patch_size=None).
    # spatial=32 keeps the pooled tile (Hp=Wp=8) sublane-aligned for the fused pool.
    N, Cin, H, W = 2, 4, 32, 32
    Cout, K = 32, 3

    key = jax.random.PRNGKey(0)
    kx, kw_, kg, kb = jax.random.split(key, 4)
    x = jax.random.normal(kx, (N, Cin, H, W), jnp.float32)
    weight = jax.random.normal(kw_, (Cout, Cin, K, K), jnp.float32) * 0.1
    gamma = jnp.abs(jax.random.normal(kg, (Cout,), jnp.float32)) + 0.5
    beta = jax.random.normal(kb, (Cout,), jnp.float32) * 0.1

    out = stem_forward(x, weight, gamma, beta, tm=128)   # tm=128 -> 4 parallel grid steps
    out = jax.block_until_ready(out)

    ref = jax.block_until_ready(_reference(x, weight, gamma, beta))
    assert out.shape == ref.shape == (N, Cout, 8, 8), (out.shape, ref.shape)
    # bf16 matmul operands + bf16-stored intermediate -> slightly looser tolerance.
    if not jnp.allclose(out, ref, atol=3e-2, rtol=3e-2):
        err = float(jnp.max(jnp.abs(out - ref)))
        raise AssertionError(f"Pallas Stem output does not match reference (max abs err {err})")

    print("KERNEL_OK")
</pallas_src>

<mosaic_0001>
module attributes {stable_mosaic.version = 11 : i64} {
  func.func @_conv_stats_kernel(%arg0: i32, %arg1: memref<128x36xbf16, #tpu.memory_space<vmem>>, %arg2: memref<36x32xbf16, #tpu.memory_space<vmem>>, %arg3: memref<128x32xbf16, #tpu.memory_space<vmem>>, %arg4: memref<1x1x32xf32, #tpu.memory_space<vmem>>, %arg5: memref<1x1x32xf32, #tpu.memory_space<vmem>>) attributes {dimension_semantics = [#tpu.dimension_semantics<parallel>], iteration_bounds = array<i64: 4>, scalar_prefetch = 0 : i64, scratch_operands = 0 : i64, tpu.core_type = #tpu.core_type<tc>, window_params = [{transform_indices = @transform_0, window_bounds = array<i64: 128, 36>}, {pipeline_mode = #tpu.pipeline_mode<synchronous>, transform_indices = @transform_1, window_bounds = array<i64: 36, 32>}, {transform_indices = @transform_2, window_bounds = array<i64: 128, 32>}, {transform_indices = @transform_3, window_bounds = array<i64: 1, 1, 32>}, {transform_indices = @transform_4, window_bounds = array<i64: 1, 1, 32>}]} {
    %c0 = arith.constant 0 : index
    %c0_0 = arith.constant 0 : index
    %0 = vector.load %arg1[%c0, %c0_0] : memref<128x36xbf16, #tpu.memory_space<vmem>>, vector<128x36xbf16>
    %c0_1 = arith.constant 0 : index
    %c0_2 = arith.constant 0 : index
    %1 = vector.load %arg2[%c0_1, %c0_2] : memref<36x32xbf16, #tpu.memory_space<vmem>>, vector<36x32xbf16>
    %cst = arith.constant dense<0.000000e+00> : vector<128x32xf32>
    %2 = tpu.matmul %0, %1, %cst {dimension_numbers = #tpu.dot_dimension_numbers<[1], [0], [0], [1], [0, 0, 1, 1], [], []>} : vector<128x36xbf16>, vector<36x32xbf16>, vector<128x32xf32> -> vector<128x32xf32>
    %3 = arith.truncf %2 : vector<128x32xf32> to vector<128x32xbf16>
    %c0_3 = arith.constant 0 : index
    %c0_4 = arith.constant 0 : index
    %4 = vector.load %arg3[%c0_3, %c0_4] : memref<128x32xbf16, #tpu.memory_space<vmem>>, vector<128x32xbf16>
    tpu.vector_store %arg3[%c0_3, %c0_4], %3 {strides = array<i32>} : memref<128x32xbf16, #tpu.memory_space<vmem>>, vector<128x32xbf16>,
    %cst_5 = arith.constant dense<0.000000e+00> : vector<32xf32>
    %5 = vector.multi_reduction <add>, %2, %cst_5 [0] : vector<128x32xf32> to vector<32xf32>
    %6 = vector.shape_cast %5 : vector<32xf32> to vector<1x32xf32>
    %c0_6 = arith.constant 0 : index
    %c0_7 = arith.constant 0 : index
    %c0_8 = arith.constant 0 : index
    %7 = vector.load %arg4[%c0_6, %c0_7, %c0_8] : memref<1x1x32xf32, #tpu.memory_space<vmem>>, vector<1x1x32xf32>
    %8 = vector.shape_cast %7 : vector<1x1x32xf32> to vector<1x32xf32>
    %9 = vector.shape_cast %6 : vector<1x32xf32> to vector<1x1x32xf32>
    tpu.vector_store %arg4[%c0_6, %c0_7, %c0_8], %9 {strides = array<i32>} : memref<1x1x32xf32, #tpu.memory_space<vmem>>, vector<1x1x32xf32>,
    %10 = arith.mulf %2, %2 : vector<128x32xf32>
    %cst_9 = arith.constant dense<0.000000e+00> : vector<32xf32>
    %11 = vector.multi_reduction <add>, %10, %cst_9 [0] : vector<128x32xf32> to vector<32xf32>
    %12 = vector.shape_cast %11 : vector<32xf32> to vector<1x32xf32>
    %c0_10 = arith.constant 0 : index
    %c0_11 = arith.constant 0 : index
    %c0_12 = arith.constant 0 : index
    %13 = vector.load %arg5[%c0_10, %c0_11, %c0_12] : memref<1x1x32xf32, #tpu.memory_space<vmem>>, vector<1x1x32xf32>
    %14 = vector.shape_cast %13 : vector<1x1x32xf32> to vector<1x32xf32>
    %15 = vector.shape_cast %12 : vector<1x32xf32> to vector<1x1x32xf32>
    tpu.vector_store %arg5[%c0_10, %c0_11, %c0_12], %15 {strides = array<i32>} : memref<1x1x32xf32, #tpu.memory_space<vmem>>, vector<1x1x32xf32>,
    return
  }
  func.func @transform_0(%arg0: i32) -> (i32, i32) {
    %c0_i32 = arith.constant 0 : i32
    %c0_i32_0 = arith.constant 0 : i32
    return %arg0, %c0_i32 : i32, i32
  }
  func.func @transform_1(%arg0: i32) -> (i32, i32) {
    %c0_i32 = arith.constant 0 : i32
    %c0_i32_0 = arith.constant 0 : i32
    %c0_i32_1 = arith.constant 0 : i32
    return %c0_i32, %c0_i32_0 : i32, i32
  }
  func.func @transform_2(%arg0: i32) -> (i32, i32) {
    %c0_i32 = arith.constant 0 : i32
    %c0_i32_0 = arith.constant 0 : i32
    return %arg0, %c0_i32 : i32, i32
  }
  func.func @transform_3(%arg0: i32) -> (i32, i32, i32) {
    %c0_i32 = arith.constant 0 : i32
    %c0_i32_0 = arith.constant 0 : i32
    %c0_i32_1 = arith.constant 0 : i32
    return %arg0, %c0_i32, %c0_i32_0 : i32, i32, i32
  }
  func.func @transform_4(%arg0: i32) -> (i32, i32, i32) {
    %c0_i32 = arith.constant 0 : i32
    %c0_i32_0 = arith.constant 0 : i32
    %c0_i32_1 = arith.constant 0 : i32
    return %arg0, %c0_i32, %c0_i32_0 : i32, i32, i32
  }
}

</mosaic_0001>

<llo_original>
// kernel: tpu_custom_call.1
$region0: #{tpu_custom_call.1}
  #allocation0 [shape = 'u32[]', space=smem, size = 0x4, offset = 0x4, fixed_abs, tag = 'smem constant byte address 0x4 - core index']
  #allocation1 [shape = 'u32[144,128]{1,0:T(1,128)}', space=vmem, size = 0x12000, scoped, tag = 'internal scratch']
  %s0 = inlined_call_operand.vmem [shape: bf16[512,36], index: 0, kind: input, shape index: {}]
  %s1 = inlined_call_operand.vmem [shape: bf16[36,32], index: 1, kind: input, shape index: {}]
  %s2 = inlined_call_operand.vmem [shape: bf16[512,32], index: 2, kind: output, shape index: {0}]
  %s3 = inlined_call_operand.hbm [shape: f32[4,1,32], index: 3, kind: output, shape index: {1}]
  %s4 = inlined_call_operand.hbm [shape: f32[4,1,32], index: 4, kind: output, shape index: {2}]
  %5 = xla_tuple %s2, %s3, %s4
  %s6 = sld [smem:[#allocation0]]
  $region57: #{tpu_custom_call.1} parent=0
    _
  %s8 = ssub.s32 1, %s6
  %s9 = scalar_select 0, %s8, %s6
  $region1: #{tpu_custom_call.1} parent=0
    #allocation2 [shape = 'u8[1024]{0}', space=vmem, size = 0x400, scoped, tag = 'output window, operand 1']
    #allocation3 [shape = 's32[2]{0}', space=sflag, size = 0x8, scoped, tag = 'scoped memory for tpu_custom_call.1']
    #allocation4 [shape = 'u8[1024]{0}', space=vmem, size = 0x400, scoped, tag = 'output window, operand 2']
    #allocation5 [shape = 's32[2]{0}', space=sflag, size = 0x8, scoped, tag = 'scoped memory for tpu_custom_call.1']
    %10 = vsyncpa [#allocation3], 0
    %s11 = scalar_lea.sflag [#allocation3], 1
    %12 = vsyncpa %s11, 0
    %13 = vsyncpa [#allocation5], 0
    %s14 = scalar_lea.sflag [#allocation5], 1
    %15 = vsyncpa %s14, 0
    loop: start=0, step=1, limit=6
    $region2: #{tpu_custom_call.1} parent=1 // loop_pre_header
      _
    $region3: #{tpu_custom_call.1} parent=1 // loop_header
      %s17 = sphi 0, %s21
      %p18 = scmp.ge.s32.totalorder %s17, 6
      %s27 = sphi 0, %s29
      %s30 = sphi 0, %s27
      %s31 = sphi 0, %s30
      %s47 = sphi 0, %s31
      %s51 = sphi 0, %s51
      %s53 = sphi 0, %s51
      %s54 = sphi 0, %s53
      %s68 = sphi 0, %s54
      %s74 = sphi 0, %s76
      %s77 = sphi 0, %s74
      %s78 = sphi 0, %s77
      %s94 = sphi 0, %s78
      %s100 = sphi 0, %s102
      %s103 = sphi 0, %s100
      %s104 = sphi 0, %s103
      %s120 = sphi 0, %s104
      %s126 = sphi 0, %s128
      %s129 = sphi 0, %s126
      %s130 = sphi 0, %s129
      %s146 = sphi 0, %s130
    $region4: #{tpu_custom_call.1} parent=1 // loop_header_branch
      %20 = sbr.rel (%p18) target = $region8
    $region5: #{tpu_custom_call.1} parent=1 // loop_body
      %s22 = ssub.s32 %s17, 1
      %s23 = ssub.s32 %s17, 2
      %s24 = sadd.s32 %s17, 1
      %s25 = ssub.s32 %s17, %s24
      %p26 = scmp.eq.s32.totalorder %s25, 0
      %s28 = sadd.s32 %s27, 1
      %s29 = scalar_select %p26, %s27, %s28
      %p32 = pneg %p26
      %p33 = scmp.eq.s32.totalorder %s17, 3
      %p34 = por %p32, %p33
      %p35 = scmp.ne.s32.totalorder %s27, %s30
      %p36 = scmp.eq.s32.totalorder %s17, 0
      %p37 = por %p35, %p36
      %p38 = scmp.ne.s32.totalorder %s27, %s30
      %p39 = scmp.eq.s32.totalorder %s22, 3
      %p40 = por %p38, %p39
      %p41 = scmp.ne.s32.totalorder %s30, %s31
      %p42 = scmp.eq.s32.totalorder %s22, 0
      %p43 = por %p41, %p42
      %p44 = scmp.ne.s32.totalorder %s30, %s31
      %p45 = scmp.eq.s32.totalorder %s23, 3
      %p46 = por %p44, %p45
      %p48 = scmp.ne.s32.totalorder %s31, %s47
      %p49 = scmp.eq.s32.totalorder %s23, 0
      %p50 = por %p48, %p49
      %s52 = sadd.s32 %s51, 1
      %p55 = scmp.eq.s32.totalorder %s17, 3
      %p56 = scmp.ne.s32.totalorder %s51, %s53
      %p57 = scmp.eq.s32.totalorder %s17, 0
      %p58 = por %p56, %p57
      %p59 = scmp.ne.s32.totalorder %s51, %s53
      %p60 = scmp.eq.s32.totalorder %s22, 3
      %p61 = por %p59, %p60
      %p62 = scmp.ne.s32.totalorder %s53, %s54
      %p63 = scmp.eq.s32.totalorder %s22, 0
      %p64 = por %p62, %p63
      %p65 = scmp.ne.s32.totalorder %s53, %s54
      %p66 = scmp.eq.s32.totalorder %s23, 3
      %p67 = por %p65, %p66
      %p69 = scmp.ne.s32.totalorder %s54, %s68
      %p70 = scmp.eq.s32.totalorder %s23, 0
      %p71 = por %p69, %p70
      %s72 = ssub.s32 %s17, %s24
      %p73 = scmp.eq.s32.totalorder %s72, 0
      %s75 = sadd.s32 %s74, 1
      %s76 = scalar_select %p73, %s74, %s75
      %p79 = pneg %p73
      %p80 = scmp.eq.s32.totalorder %s17, 3
      %p81 = por %p79, %p80
      %p82 = scmp.ne.s32.totalorder %s74, %s77
      %p83 = scmp.eq.s32.totalorder %s17, 0
      %p84 = por %p82, %p83
      %p85 = scmp.ne.s32.totalorder %s74, %s77
      %p86 = scmp.eq.s32.totalorder %s22, 3
      %p87 = por %p85, %p86
      %p88 = scmp.ne.s32.totalorder %s77, %s78
      %p89 = scmp.eq.s32.totalorder %s22, 0
      %p90 = por %p88, %p89
      %p91 = scmp.ne.s32.totalorder %s77, %s78
      %p92 = scmp.eq.s32.totalorder %s23, 3
      %p93 = por %p91, %p92
      %p95 = scmp.ne.s32.totalorder %s78, %s94
      %p96 = scmp.eq.s32.totalorder %s23, 0
      %p97 = por %p95, %p96
      %s98 = ssub.s32 %s17, %s24
      %p99 = scmp.eq.s32.totalorder %s98, 0
      %s101 = sadd.s32 %s100, 1
      %s102 = scalar_select %p99, %s100, %s101
      %p105 = pneg %p99
      %p106 = scmp.eq.s32.totalorder %s17, 3
      %p107 = por %p105, %p106
      %p108 = scmp.ne.s32.totalorder %s100, %s103
      %p109 = scmp.eq.s32.totalorder %s17, 0
      %p110 = por %p108, %p109
      %p111 = scmp.ne.s32.totalorder %s100, %s103
      %p112 = scmp.eq.s32.totalorder %s22, 3
      %p113 = por %p111, %p112
      %p114 = scmp.ne.s32.totalorder %s103, %s104
      %p115 = scmp.eq.s32.totalorder %s22, 0
      %p116 = por %p114, %p115
      %p117 = scmp.ne.s32.totalorder %s103, %s104
      %p118 = scmp.eq.s32.totalorder %s23, 3
      %p119 = por %p117, %p118
      %p121 = scmp.ne.s32.totalorder %s104, %s120
      %p122 = scmp.eq.s32.totalorder %s23, 0
      %p123 = por %p121, %p122
      %s124 = ssub.s32 %s17, %s24
      %p125 = scmp.eq.s32.totalorder %s124, 0
      %s127 = sadd.s32 %s126, 1
      %s128 = scalar_select %p125, %s126, %s127
      %p131 = pneg %p125
      %p132 = scmp.eq.s32.totalorder %s17, 3
      %p133 = por %p131, %p132
      %p134 = scmp.ne.s32.totalorder %s126, %s129
      %p135 = scmp.eq.s32.totalorder %s17, 0
      %p136 = por %p134, %p135
      %p137 = scmp.ne.s32.totalorder %s126, %s129
      %p138 = scmp.eq.s32.totalorder %s22, 3
      %p139 = por %p137, %p138
      %p140 = scmp.ne.s32.totalorder %s129, %s130
      %p141 = scmp.eq.s32.totalorder %s22, 0
      %p142 = por %p140, %p141
      %p143 = scmp.ne.s32.totalorder %s129, %s130
      %p144 = scmp.eq.s32.totalorder %s23, 3
      %p145 = por %p143, %p144
      %p147 = scmp.ne.s32.totalorder %s130, %s146
      %p148 = scmp.eq.s32.totalorder %s23, 0
      %p149 = por %p147, %p148
      %p150 = scmp.le.s32.totalorder 1, %s17
      %p151 = scmp.lt.s32.totalorder %s17, 5
      %p152 = pnand %p150, %p151
      %p153 = pneg %p152
      // Predicated region
      $region9: #{tpu_custom_call.1} parent=5 // pred_check
        _
      $region10: #{tpu_custom_call.1} parent=5 // pred_check_branch
        %155 = sbr.rel (%p152) target = $region12
      $region11: #{tpu_custom_call.1} parent=5 // pred_region
        %s156 = ssub.s32 %s17, 1
        // Predicated region
        $region13: #{tpu_custom_call.1} parent=11 // pred_check
          %p157 = pneg %p64
        $region14: #{tpu_custom_call.1} parent=11 // pred_check_branch
          %159 = sbr.rel (%p157) target = $region16
        $region15: #{tpu_custom_call.1} parent=11 // pred_region
          _
        $region16: #{tpu_custom_call.1} parent=11 // pred_fallthru
          _
      $region12: #{tpu_custom_call.1} parent=5 // pred_fallthru
        _
      %p160 = scmp.lt.s32.totalorder %s17, 4
      // Predicated region
      $region17: #{tpu_custom_call.1} parent=5 // pred_check
        %p161 = pneg %p160
      $region18: #{tpu_custom_call.1} parent=5 // pred_check_branch
        %163 = sbr.rel (%p161) target = $region20
      $region19: #{tpu_custom_call.1} parent=5 // pred_region
        // Predicated region
        $region21: #{tpu_custom_call.1} parent=19 // pred_check
          %p164 = pneg %p37
        $region22: #{tpu_custom_call.1} parent=19 // pred_check_branch
          %166 = sbr.rel (%p164) target = $region24
        $region23: #{tpu_custom_call.1} parent=19 // pred_region
          %s167 = smul.u32 16, %s17
          %p168 = scmp.lt.s32.totalorder %s167, 63
          %s169 = scalar_select %p168, %s167, 63
          %s170 = smul.addr %s169, 4
          %s171 = scalar_lea.vmem %s0, %s170
          %s172 = smul.u32 16, %s17
        $region24: #{tpu_custom_call.1} parent=19 // pred_fallthru
          _
      $region20: #{tpu_custom_call.1} parent=5 // pred_fallthru
        _
      %p173 = scmp.le.s32.totalorder 1, %s17
      %p174 = scmp.lt.s32.totalorder %s17, 5
      %p175 = pnand %p173, %p174
      %p176 = pneg %p175
      // Predicated region
      $region25: #{tpu_custom_call.1} parent=5 // pred_check
        _
      $region26: #{tpu_custom_call.1} parent=5 // pred_check_branch
        %178 = sbr.rel (%p175) target = $region28
      $region27: #{tpu_custom_call.1} parent=5 // pred_region
        %s179 = ssub.s32 %s17, 1
        %s180 = smul.u32 16, %s22
        %p181 = scmp.lt.s32.totalorder %s180, 63
        %s182 = scalar_select %p181, %s180, 63
        %s183 = smul.addr %s182, 4
        %s184 = scalar_lea.vmem %s0, %s183
        %p185 = pneg %p43
        %p186 = pneg %p40
        %p187 = pneg %p64
        %p188 = pneg %p61
        %p189 = pneg %p90
        %p190 = pneg %p87
        %s191 = smul.u32 16, %s22
        %p192 = scmp.lt.s32.totalorder %s191, 63
        %s193 = scalar_select %p192, %s191, 63
        %s194 = smul.addr %s193, 4
        %s195 = scalar_lea.vmem %s2, %s194
        %p196 = pneg %p116
        %p197 = pneg %p113
        %s198 = sand.u32 %s103, 1
        %s199 = scalar_lea.sflag [#allocation3], %s198
        %s200 = sand.u32 %s103, 1
        %s201 = scalar_lea.vmem [#allocation2], %s200
        %p202 = pneg %p142
        %p203 = pneg %p139
        %s204 = sand.u32 %s129, 1
        %s205 = scalar_lea.sflag [#allocation5], %s204
        %s206 = sand.u32 %s129, 1
        %s207 = scalar_lea.vmem [#allocation4], %s206
        %s208 = smul.u32 16, %s22
        %p209 = scmp.lt.s32.totalorder %s208, 63
        %s210 = scalar_select %p209, %s208, 63
        %s211 = smul.addr %s210, 4
        %s212 = scalar_lea.vmem %s0, %s211
        %s213 = smul.u32 16, %s22
        %s214 = smul.u32 16, %s22
        %p215 = scmp.lt.s32.totalorder %s214, 63
        %s216 = scalar_select %p215, %s214, 63
        %s217 = smul.addr %s216, 4
        %s218 = scalar_lea.vmem %s2, %s217
        %s219 = smul.u32 16, %s22
        %v221 = vld [vmem:[%s212] sm:$0xf]
        %v222 = vld [vmem:[%s212 + $0x4] sm:$0xf]
        %v223 = vld [vmem:[%s212 + $0x8] sm:$0xf]
        %v224 = vld [vmem:[%s212 + $0xc] sm:$0xf]
        %v225 = vld [vmem:[%s212 + $0x10] sm:$0xf]
        %v226 = vld [vmem:[%s212 + $0x14] sm:$0xf]
        %v227 = vld [vmem:[%s212 + $0x18] sm:$0xf]
        %v228 = vld [vmem:[%s212 + $0x1c] sm:$0xf]
        %v229 = vld [vmem:[%s212 + $0x20] sm:$0xf]
        %v230 = vld [vmem:[%s212 + $0x24] sm:$0xf]
        %v231 = vld [vmem:[%s212 + $0x28] sm:$0xf]
        %v232 = vld [vmem:[%s212 + $0x2c] sm:$0xf]
        %v233 = vld [vmem:[%s212 + $0x30] sm:$0xf]
        %v234 = vld [vmem:[%s212 + $0x34] sm:$0xf]
        %v235 = vld [vmem:[%s212 + $0x38] sm:$0xf]
        %v236 = vld [vmem:[%s212 + $0x3c] sm:$0xf]
        %v237 = vld [vmem:[%s1] sm:$0xf]
        %v238 = vld [vmem:[%s1 + $0x4] sm:$0xf]
        %v239 = vld [vmem:[%s1 + $0x8] sm:$0xf]
        %v240 = vld [vmem:[%s1 + $0xc] sm:$0xf]
        %v241 = vld [vmem:[%s1 + $0x10] sm:$0x3]
        %v258 = vunpack.c.l.b16 %v221
        %v259 = vunpack.c.l.b16 %v222
        %v260 = vunpack.c.l.b16 %v223
        %v261 = vunpack.c.l.b16 %v224
        %v262 = vunpack.c.l.b16 %v225
        %v263 = vunpack.c.l.b16 %v226
        %v264 = vunpack.c.l.b16 %v227
        %v265 = vunpack.c.l.b16 %v228
        %v266 = vunpack.c.l.b16 %v229
        %v267 = vunpack.c.l.b16 %v230
        %v268 = vunpack.c.l.b16 %v231
        %v269 = vunpack.c.l.b16 %v232
        %v270 = vunpack.c.l.b16 %v233
        %v271 = vunpack.c.l.b16 %v234
        %v272 = vunpack.c.l.b16 %v235
        %v273 = vunpack.c.l.b16 %v236
        %v274 = vpack.c.b16 %v259, %v258
        %v275 = vpack.c.b16 %v261, %v260
        %v276 = vpack.c.b16 %v263, %v262
        %v277 = vpack.c.b16 %v265, %v264
        %v278 = vpack.c.b16 %v267, %v266
        %v279 = vpack.c.b16 %v269, %v268
        %v280 = vpack.c.b16 %v271, %v270
        %v281 = vpack.c.b16 %v273, %v272
        %v287 = vunpack.c.l.b16 %v237
        %v288 = vunpack.c.l.b16 %v238
        %v289 = vunpack.c.l.b16 %v239
        %v290 = vunpack.c.l.b16 %v240
        %v291 = vunpack.c.l.b16 %v241
        %v292 = vpack.c.b16 %v288, %v287
        %v293 = vpack.c.b16 %v290, %v289
        %v294 = vpack.c.b16 %v291, %v291
        %vm297 = vcmask 293888
        %v299 = vsel %vm297, %v274, 0
        %v302 = vsel %vm297, %v275, 0
        %v305 = vsel %vm297, %v276, 0
        %v308 = vsel %vm297, %v277, 0
        %v311 = vsel %vm297, %v278, 0
        %v314 = vsel %vm297, %v279, 0
        %v317 = vsel %vm297, %v280, 0
        %v320 = vsel %vm297, %v281, 0
        %vm322 = vcmask 1041408
        %v324 = vsel %vm322, %v294, 0
        %326 = vmatprep.subr.bf16.mxu0 0
        %327 = vmatpush1.bf16.msra.mxu0 %v292
        %328 = vmatprep.subr.bf16.mxu0 0
        %329 = vmatpush1.bf16.msra.mxu0 %v293
        %330 = vmatprep.subr.bf16.mxu0 0
        %331 = vmatpush1.bf16.msra.mxu0 %v324
        %332 = vmatprep.subr.bf16.mxu0 0
        %333 = vmatpush1.bf16.msra.mxu0 0
        %334 = vmatprep.subr.bf16.mxu0 0
        %335 = vmatpush1.bf16.msra.mxu0 0
        %336 = vmatprep.subr.bf16.mxu0 0
        %337 = vmatpush1.bf16.msra.mxu0 0
        %338 = vmatprep.subr.bf16.mxu0 0
        %339 = vmatpush1.bf16.msra.mxu0 0
        %340 = vmatprep.subr.bf16.mxu0 0
        %341 = vmatpush1.bf16.msra.mxu0 0
        %342 = vmatprep.subr.bf16.mxu0 0
        %343 = vmatpush1.bf16.msra.mxu0 0
        %344 = vmatprep.subr.bf16.mxu0 0
        %345 = vmatpush1.bf16.msra.mxu0 0
        %346 = vmatprep.subr.bf16.mxu0 0
        %347 = vmatpush1.bf16.msra.mxu0 0
        %348 = vmatprep.subr.bf16.mxu0 0
        %349 = vmatpush1.bf16.msra.mxu0 0
        %350 = vmatprep.subr.bf16.mxu0 0
        %351 = vmatpush1.bf16.msra.mxu0 0
        %352 = vmatprep.subr.bf16.mxu0 0
        %353 = vmatpush1.bf16.msra.mxu0 0
        %354 = vmatprep.subr.bf16.mxu0 0
        %355 = vmatpush1.bf16.msra.mxu0 0
        %356 = vmatprep.subr.bf16.mxu0 0
        %357 = vmatpush1.bf16.msra.mxu0 0
        %358 = vmatprep.mubr.bf16.mxu0 0
        %359 = vmatmul.mubr.bf16.gmra.mrb[0].mxu0 %v299
        %v360 = vpop.f32.mrb[0].mxu0
        %v361 = vadd.f32 0.0, %v360
        %v362 = vpop.f32.mrb[0].mxu0
        %v363 = vpop.f32.mrb[0].mxu0
        %v364 = vadd.f32 0.0, %v363
        %v365 = vpop.f32.mrb[0].mxu0
        %366 = vmatprep.mubr.bf16.mxu0 0
        %367 = vmatmul.mubr.bf16.gmra.mrb[0].mxu0 %v302
        %v368 = vpop.f32.mrb[0].mxu0
        %v369 = vadd.f32 0.0, %v368
        %v370 = vpop.f32.mrb[0].mxu0
        %v371 = vpop.f32.mrb[0].mxu0
        %v372 = vadd.f32 0.0, %v371
        %v373 = vpop.f32.mrb[0].mxu0
        %374 = vmatprep.mubr.bf16.mxu0 0
        %375 = vmatmul.mubr.bf16.gmra.mrb[0].mxu0 %v305
        %v376 = vpop.f32.mrb[0].mxu0
        %v377 = vadd.f32 0.0, %v376
        %v378 = vpop.f32.mrb[0].mxu0
        %v379 = vpop.f32.mrb[0].mxu0
        %v380 = vadd.f32 0.0, %v379
        %v381 = vpop.f32.mrb[0].mxu0
        %382 = vmatprep.mubr.bf16.mxu0 0
        %383 = vmatmul.mubr.bf16.gmra.mrb[0].mxu0 %v308
        %v384 = vpop.f32.mrb[0].mxu0
        %v385 = vadd.f32 0.0, %v384
        %v386 = vpop.f32.mrb[0].mxu0
        %v387 = vpop.f32.mrb[0].mxu0
        %v388 = vadd.f32 0.0, %v387
        %v389 = vpop.f32.mrb[0].mxu0
        %390 = vmatprep.mubr.bf16.mxu0 0
        %391 = vmatmul.mubr.bf16.gmra.mrb[0].mxu0 %v311
        %v392 = vpop.f32.mrb[0].mxu0
        %v393 = vadd.f32 0.0, %v392
        %v394 = vpop.f32.mrb[0].mxu0
        %v395 = vpop.f32.mrb[0].mxu0
        %v396 = vadd.f32 0.0, %v395
        %v397 = vpop.f32.mrb[0].mxu0
        %398 = vmatprep.mubr.bf16.mxu0 0
        %399 = vmatmul.mubr.bf16.gmra.mrb[0].mxu0 %v314
        %v400 = vpop.f32.mrb[0].mxu0
        %v401 = vadd.f32 0.0, %v400
        %v402 = vpop.f32.mrb[0].mxu0
        %v403 = vpop.f32.mrb[0].mxu0
        %v404 = vadd.f32 0.0, %v403
        %v405 = vpop.f32.mrb[0].mxu0
        %406 = vmatprep.mubr.bf16.mxu0 0
        %407 = vmatmul.mubr.bf16.gmra.mrb[0].mxu0 %v317
        %v408 = vpop.f32.mrb[0].mxu0
        %v409 = vadd.f32 0.0, %v408
        %v410 = vpop.f32.mrb[0].mxu0
        %v411 = vpop.f32.mrb[0].mxu0
        %v412 = vadd.f32 0.0, %v411
        %v413 = vpop.f32.mrb[0].mxu0
        %414 = vmatprep.mubr.bf16.mxu0 0
        %415 = vmatmul.mubr.bf16.gmra.mrb[0].mxu0 %v320
        %v416 = vpop.f32.mrb[0].mxu0
        %v417 = vadd.f32 0.0, %v416
        %v418 = vpop.f32.mrb[0].mxu0
        %v419 = vpop.f32.mrb[0].mxu0
        %v420 = vadd.f32 0.0, %v419
        %v421 = vpop.f32.mrb[0].mxu0
        %422 = vdwg.mxu0
        %v423 = vpack.c.bf16 %v364, %v361
        %v424 = vpack.c.bf16 %v372, %v369
        %v425 = vpack.c.bf16 %v380, %v377
        %v426 = vpack.c.bf16 %v388, %v385
        %v427 = vpack.c.bf16 %v396, %v393
        %v428 = vpack.c.bf16 %v404, %v401
        %v429 = vpack.c.bf16 %v412, %v409
        %v430 = vpack.c.bf16 %v420, %v417
        %v439 = vunpack.c.l.b16 %v423
        %v440 = vunpack.c.h.b16 %v423
        %v441 = vunpack.c.l.b16 %v424
        %v442 = vunpack.c.h.b16 %v424
        %v443 = vunpack.c.l.b16 %v425
        %v444 = vunpack.c.h.b16 %v425
        %v445 = vunpack.c.l.b16 %v426
        %v446 = vunpack.c.h.b16 %v426
        %v447 = vunpack.c.l.b16 %v427
        %v448 = vunpack.c.h.b16 %v427
        %v449 = vunpack.c.l.b16 %v428
        %v450 = vunpack.c.h.b16 %v428
        %v451 = vunpack.c.l.b16 %v429
        %v452 = vunpack.c.h.b16 %v429
        %v453 = vunpack.c.l.b16 %v430
        %v454 = vunpack.c.h.b16 %v430
        %v455 = vpack.c.b16 %v439, %v439
        %v456 = vpack.c.b16 %v440, %v440
        %v457 = vpack.c.b16 %v441, %v441
        %v458 = vpack.c.b16 %v442, %v442
        %v459 = vpack.c.b16 %v443, %v443
        %v460 = vpack.c.b16 %v444, %v444
        %v461 = vpack.c.b16 %v445, %v445
        %v462 = vpack.c.b16 %v446, %v446
        %v463 = vpack.c.b16 %v447, %v447
        %v464 = vpack.c.b16 %v448, %v448
        %v465 = vpack.c.b16 %v449, %v449
        %v466 = vpack.c.b16 %v450, %v450
        %v467 = vpack.c.b16 %v451, %v451
        %v468 = vpack.c.b16 %v452, %v452
        %v469 = vpack.c.b16 %v453, %v453
        %v470 = vpack.c.b16 %v454, %v454
        %vm487 = vcmask 257024
        %488 = vst.msk [vmem:[%s218] sm:$0xf] %vm487, %v455
        %489 = vst.msk [vmem:[%s218 + $0x4] sm:$0xf] %vm487, %v456
        %490 = vst.msk [vmem:[%s218 + $0x8] sm:$0xf] %vm487, %v457
        %491 = vst.msk [vmem:[%s218 + $0xc] sm:$0xf] %vm487, %v458
        %492 = vst.msk [vmem:[%s218 + $0x10] sm:$0xf] %vm487, %v459
        %493 = vst.msk [vmem:[%s218 + $0x14] sm:$0xf] %vm487, %v460
        %494 = vst.msk [vmem:[%s218 + $0x18] sm:$0xf] %vm487, %v461
        %495 = vst.msk [vmem:[%s218 + $0x1c] sm:$0xf] %vm487, %v462
        %496 = vst.msk [vmem:[%s218 + $0x20] sm:$0xf] %vm487, %v463
        %497 = vst.msk [vmem:[%s218 + $0x24] sm:$0xf] %vm487, %v464
        %498 = vst.msk [vmem:[%s218 + $0x28] sm:$0xf] %vm487, %v465
        %499 = vst.msk [vmem:[%s218 + $0x2c] sm:$0xf] %vm487, %v466
        %500 = vst.msk [vmem:[%s218 + $0x30] sm:$0xf] %vm487, %v467
        %501 = vst.msk [vmem:[%s218 + $0x34] sm:$0xf] %vm487, %v468
        %502 = vst.msk [vmem:[%s218 + $0x38] sm:$0xf] %vm487, %v469
        %503 = vst.msk [vmem:[%s218 + $0x3c] sm:$0xf] %vm487, %v470
        %vm504 = vcmask 261120
        %v505 = vsel %vm504, %v361, 0.0
        %v506 = vsel %vm504, %v364, 0.0
        %v507 = vadd.f32 %v505, %v506
        %v508 = vsel %vm504, %v369, 0.0
        %v509 = vadd.f32 %v507, %v508
        %v510 = vsel %vm504, %v372, 0.0
        %v511 = vadd.f32 %v509, %v510
        %v512 = vsel %vm504, %v377, 0.0
        %v513 = vadd.f32 %v511, %v512
        %v514 = vsel %vm504, %v380, 0.0
        %v515 = vadd.f32 %v513, %v514
        %v516 = vsel %vm504, %v385, 0.0
        %v517 = vadd.f32 %v515, %v516
        %v518 = vsel %vm504, %v388, 0.0
        %v519 = vadd.f32 %v517, %v518
        %v520 = vsel %vm504, %v393, 0.0
        %v521 = vadd.f32 %v519, %v520
        %v522 = vsel %vm504, %v396, 0.0
        %v523 = vadd.f32 %v521, %v522
        %v524 = vsel %vm504, %v401, 0.0
        %v525 = vadd.f32 %v523, %v524
        %v526 = vsel %vm504, %v404, 0.0
        %v527 = vadd.f32 %v525, %v526
        %v528 = vsel %vm504, %v409, 0.0
        %v529 = vadd.f32 %v527, %v528
        %v530 = vsel %vm504, %v412, 0.0
        %v531 = vadd.f32 %v529, %v530
        %v532 = vsel %vm504, %v417, 0.0
        %v533 = vadd.f32 %v531, %v532
        %v534 = vsel %vm504, %v420, 0.0
        %v535 = vadd.f32 %v533, %v534
        %v536 = vrot.slane %v535, 4
        %v537 = vadd.f32 %v535, %v536
        %v538 = vrot.slane %v537, 2
        %v539 = vadd.f32 %v537, %v538
        %v540 = vrot.slane %v539, 1
        %v541 = vadd.f32 %v539, %v540
        %vm542 = vcmask 253952
        %543 = vst.msk [vmem:[%s201] sm:$0x1] %vm542, %v541
        %v544 = vmul.f32 %v361, %v361
        %v545 = vmul.f32 %v364, %v364
        %v546 = vmul.f32 %v369, %v369
        %v547 = vmul.f32 %v372, %v372
        %v548 = vmul.f32 %v377, %v377
        %v549 = vmul.f32 %v380, %v380
        %v550 = vmul.f32 %v385, %v385
        %v551 = vmul.f32 %v388, %v388
        %v552 = vmul.f32 %v393, %v393
        %v553 = vmul.f32 %v396, %v396
        %v554 = vmul.f32 %v401, %v401
        %v555 = vmul.f32 %v404, %v404
        %v556 = vmul.f32 %v409, %v409
        %v557 = vmul.f32 %v412, %v412
        %v558 = vmul.f32 %v417, %v417
        %v559 = vmul.f32 %v420, %v420
        %v560 = vsel %vm504, %v544, 0.0
        %v561 = vsel %vm504, %v545, 0.0
        %v562 = vadd.f32 %v560, %v561
        %v563 = vsel %vm504, %v546, 0.0
        %v564 = vadd.f32 %v562, %v563
        %v565 = vsel %vm504, %v547, 0.0
        %v566 = vadd.f32 %v564, %v565
        %v567 = vsel %vm504, %v548, 0.0
        %v568 = vadd.f32 %v566, %v567
        %v569 = vsel %vm504, %v549, 0.0
        %v570 = vadd.f32 %v568, %v569
        %v571 = vsel %vm504, %v550, 0.0
        %v572 = vadd.f32 %v570, %v571
        %v573 = vsel %vm504, %v551, 0.0
        %v574 = vadd.f32 %v572, %v573
        %v575 = vsel %vm504, %v552, 0.0
        %v576 = vadd.f32 %v574, %v575
        %v577 = vsel %vm504, %v553, 0.0
        %v578 = vadd.f32 %v576, %v577
        %v579 = vsel %vm504, %v554, 0.0
        %v580 = vadd.f32 %v578, %v579
        %v581 = vsel %vm504, %v555, 0.0
        %v582 = vadd.f32 %v580, %v581
        %v583 = vsel %vm504, %v556, 0.0
        %v584 = vadd.f32 %v582, %v583
        %v585 = vsel %vm504, %v557, 0.0
        %v586 = vadd.f32 %v584, %v585
        %v587 = vsel %vm504, %v558, 0.0
        %v588 = vadd.f32 %v586, %v587
        %v589 = vsel %vm504, %v559, 0.0
        %v590 = vadd.f32 %v588, %v589
        %v591 = vrot.slane %v590, 4
        %v592 = vadd.f32 %v590, %v591
        %v593 = vrot.slane %v592, 2
        %v594 = vadd.f32 %v592, %v593
        %v595 = vrot.slane %v594, 1
        %v596 = vadd.f32 %v594, %v595
        %597 = vst.msk [vmem:[%s207] sm:$0x1] %vm542, %v596
        %s598 = smul.u32 16, %s22
        %p599 = scmp.lt.s32.totalorder %s598, 63
        %s600 = scalar_select %p599, %s598, 63
        %s601 = smul.addr %s600, 4
        %s602 = scalar_lea.vmem %s2, %s601
        %s603 = sand.u32 %s103, 1
        %s604 = scalar_lea.sflag [#allocation3], %s603
        %s605 = sand.u32 %s103, 1
        %s606 = scalar_lea.vmem [#allocation2], %s605
        %s607 = sand.u32 %s129, 1
        %s608 = scalar_lea.sflag [#allocation5], %s607
        %s609 = sand.u32 %s129, 1
        %s610 = scalar_lea.vmem [#allocation4], %s609
        // Predicated region
        $region29: #{tpu_custom_call.1} parent=27 // pred_check
          %p611 = pneg %p87
        $region30: #{tpu_custom_call.1} parent=27 // pred_check_branch
          %613 = sbr.rel (%p611) target = $region32
        $region31: #{tpu_custom_call.1} parent=27 // pred_region
          %s614 = smul.u32 16, %s22
        $region32: #{tpu_custom_call.1} parent=27 // pred_fallthru
          _
        // Predicated region
        $region33: #{tpu_custom_call.1} parent=27 // pred_check
          %p615 = pneg %p113
        $region34: #{tpu_custom_call.1} parent=27 // pred_check_branch
          %617 = sbr.rel (%p615) target = $region36
        $region35: #{tpu_custom_call.1} parent=27 // pred_region
          %s619 = ssub.s32 16, 16
          %620 = vsyncadd %s604, %s619
          %s621 = smul.addr %s22, 16
          %s622 = scalar_lea.hbm %s3, %s621
          %s624 = sshll.u32 %s606, 4
          %s625 = int_to_ptr.vmem [resolvable:$true] %s624
          %627 = dma.vmem_to_hbm [thread:$0]  %s625, 16, %s622, %s604
        $region36: #{tpu_custom_call.1} parent=27 // pred_fallthru
          _
        // Predicated region
        $region37: #{tpu_custom_call.1} parent=27 // pred_check
          %p628 = pneg %p139
        $region38: #{tpu_custom_call.1} parent=27 // pred_check_branch
          %630 = sbr.rel (%p628) target = $region40
        $region39: #{tpu_custom_call.1} parent=27 // pred_region
          %s632 = ssub.s32 16, 16
          %633 = vsyncadd %s608, %s632
          %s634 = smul.addr %s22, 16
          %s635 = scalar_lea.hbm %s4, %s634
          %s637 = sshll.u32 %s610, 4
          %s638 = int_to_ptr.vmem [resolvable:$true] %s637
          %640 = dma.vmem_to_hbm [thread:$0]  %s638, 16, %s635, %s608
        $region40: #{tpu_custom_call.1} parent=27 // pred_fallthru
          _
      $region28: #{tpu_custom_call.1} parent=5 // pred_fallthru
        _
      %p641 = scmp.le.s32.totalorder 2, %s17
      // Predicated region
      $region41: #{tpu_custom_call.1} parent=5 // pred_check
        %p642 = pneg %p641
      $region42: #{tpu_custom_call.1} parent=5 // pred_check_branch
        %644 = sbr.rel (%p642) target = $region44
      $region43: #{tpu_custom_call.1} parent=5 // pred_region
        %s645 = ssub.s32 %s17, 2
        // Predicated region
        $region45: #{tpu_custom_call.1} parent=43 // pred_check
          %p646 = pneg %p93
        $region46: #{tpu_custom_call.1} parent=43 // pred_check_branch
          %648 = sbr.rel (%p646) target = $region48
        $region47: #{tpu_custom_call.1} parent=43 // pred_region
          %s649 = smul.u32 16, %s23
          %p650 = scmp.lt.s32.totalorder %s649, 63
          %s651 = scalar_select %p650, %s649, 63
          %s652 = smul.addr %s651, 4
          %s653 = scalar_lea.vmem %s2, %s652
        $region48: #{tpu_custom_call.1} parent=43 // pred_fallthru
          _
        // Predicated region
        $region49: #{tpu_custom_call.1} parent=43 // pred_check
          %p654 = pneg %p119
        $region50: #{tpu_custom_call.1} parent=43 // pred_check_branch
          %656 = sbr.rel (%p654) target = $region52
        $region51: #{tpu_custom_call.1} parent=43 // pred_region
          %s657 = sand.u32 %s104, 1
          %s658 = scalar_lea.sflag [#allocation3], %s657
          %s659 = sand.u32 %s104, 1
          %s660 = scalar_lea.vmem [#allocation2], %s659
          %661 = dma.done %s658, 16
        $region52: #{tpu_custom_call.1} parent=43 // pred_fallthru
          _
        // Predicated region
        $region53: #{tpu_custom_call.1} parent=43 // pred_check
          %p662 = pneg %p145
        $region54: #{tpu_custom_call.1} parent=43 // pred_check_branch
          %664 = sbr.rel (%p662) target = $region56
        $region55: #{tpu_custom_call.1} parent=43 // pred_region
          %s665 = sand.u32 %s130, 1
          %s666 = scalar_lea.sflag [#allocation5], %s665
          %s667 = sand.u32 %s130, 1
          %s668 = scalar_lea.vmem [#allocation4], %s667
          %669 = dma.done %s666, 16
        $region56: #{tpu_custom_call.1} parent=43 // pred_fallthru
          _
      $region44: #{tpu_custom_call.1} parent=5 // pred_fallthru
        _
    $region6: #{tpu_custom_call.1} parent=1 // loop_footer
      %s21 = sadd.s32 1, %s17
    $region7: #{tpu_custom_call.1} parent=1 // loop_footer_branch
      %16 = sbr.rel target = $region3
    $region8: #{tpu_custom_call.1} parent=1 // loop_exit
      _
    %670 = vsyncpa [#allocation3], 1
    %s671 = scalar_lea.sflag [#allocation3], 1
    %672 = vsyncpa %s671, 1
    %673 = vsyncpa [#allocation5], 1
    %s674 = scalar_lea.sflag [#allocation5], 1
    %675 = vsyncpa %s674, 1

</llo_original>
